<compile_context>
chip_gen: v7x
topology: tpu7x:2x2x1
jax: 0.10.0
libtpu: 0.0.40
codegen_flags: <defaults>
</compile_context>

<pallas_src>
import functools

import jax
import jax.numpy as jnp
from jax.experimental import pallas as pl
from jax.experimental.pallas import tpu as pltpu

_LANES = 128
_BLOCK_BYTE_TARGET = 4 * 1024 * 1024   # per-input block byte target (2-8 MiB range)
_HEADROOM_BYTES = 1 * 1024 * 1024


def _round_up(x, m):
    return ((x + m - 1) // m) * m


def _sublane_multiple(dtype):
    # Native packed tiling: (8,128) f32, (16,128) bf16, (32,128) int8/fp8.
    return {4: 8, 2: 16, 1: 32}.get(jnp.dtype(dtype).itemsize, 8)


def _vmem_budget_bytes():
    """Scoped-VMEM budget derived from the actual chip (v7x: 48 MiB, v5e/v6e: 96 MiB)."""
    phys = None
    try:
        phys = getattr(pltpu.get_tpu_info(), "vmem_capacity_bytes", None)
    except Exception:
        phys = None
    if not phys:
        phys = 64 * 1024 * 1024          # conservative (v7x-sized) fallback
    return int(min(phys * 3 // 4, 96 * 1024 * 1024))


def _choose_rows(rows, width, itemsize, sub, budget, extra_per_row=0):
    """Rows per block: as large as the byte target / budget allow, >=2 tiles if possible."""
    per_row = 6 * width * itemsize + extra_per_row   # 3 inputs x 2 pipeline buffers
    cap_budget = (budget - _HEADROOM_BYTES) // per_row
    cap_target = _BLOCK_BYTE_TARGET // (width * itemsize)
    cap_rows = (rows // sub) * sub                    # never exceed the array
    cap_two = _round_up(pl.cdiv(rows, 2), sub)        # >= 2 grid steps (v7x: 2 TCs)
    tb = min(cap_budget, cap_target, cap_rows, cap_two)
    return max(sub, (tb // sub) * sub)


def _fold_kernel(a_ref, p_ref, n_ref, o_ref, *, margin, feat, group, n_rows,
                 tile_rows, need_mask):
    """Lane-dense path: each 128-lane row holds `group` samples of `feat` features."""
    i = pl.program_id(0)
    a = a_ref[...].astype(jnp.float32)
    p = p_ref[...].astype(jnp.float32)
    n = n_ref[...].astype(jnp.float32)
    # dp - dn == sum((a-p)^2 - (a-n)^2) == sum((n-p)*((a-p)+(a-n))) : one pass.
    cross = (n - p) * ((a - p) + (a - n))                         # (TB, 128)
    # Per-sample segment sums over the lane axis via a tiny indicator matmul
    # (MXU is otherwise idle in this bandwidth-bound kernel).
    lane = jax.lax.broadcasted_iota(jnp.int32, (_LANES, group), 0)
    grp = jax.lax.broadcasted_iota(jnp.int32, (_LANES, group), 1)
    sel = (lane // feat == grp).astype(jnp.float32)               # (128, k)
    dist = jnp.dot(cross, sel, preferred_element_type=jnp.float32)  # (TB, k)
    losses = jnp.maximum(dist + margin, 0.0)
    if need_mask:  # static: only emitted for a partial tail tile
        row = i * tile_rows + jax.lax.broadcasted_iota(jnp.int32, losses.shape, 0)
        losses = jnp.where(row < n_rows, losses, 0.0)
    o_ref[...] = jnp.full(o_ref.shape, jnp.sum(losses), dtype=jnp.float32)


def _tiled_kernel(a_ref, p_ref, n_ref, o_ref, acc_ref, *, margin, batch, feat,
                  tile_b, tile_d, need_row_mask, need_col_mask):
    """General path: grid = (batch tiles [parallel], feature tiles [arbitrary])."""
    i = pl.program_id(0)
    kd = pl.program_id(1)

    a = a_ref[...].astype(jnp.float32)
    p = p_ref[...].astype(jnp.float32)
    n = n_ref[...].astype(jnp.float32)
    cross = (n - p) * ((a - p) + (a - n))                         # (TB, TD)
    if need_col_mask:  # static: partial tail feature tile
        col = kd * tile_d + jax.lax.broadcasted_iota(jnp.int32, cross.shape, 1)
        cross = jnp.where(col < feat, cross, 0.0)
    partial = jnp.sum(cross, axis=1, keepdims=True)               # (TB, 1)

    @pl.when(kd == 0)
    def _():
        acc_ref[...] = jnp.zeros_like(acc_ref)

    acc_ref[...] += partial

    @pl.when(kd == pl.num_programs(1) - 1)
    def _():
        losses = jnp.maximum(acc_ref[...] + margin, 0.0)          # (TB, 1)
        if need_row_mask:  # static: partial tail batch tile
            row = i * tile_b + jax.lax.broadcasted_iota(jnp.int32, losses.shape, 0)
            losses = jnp.where(row < batch, losses, 0.0)
        o_ref[...] = jnp.full(o_ref.shape, jnp.sum(losses), dtype=jnp.float32)


def triplet_loss(anchor, positive, negative, margin: float = 1.0, *,
                 tile_b=None, tile_d=None):
    """Pallas TPU implementation of TripletLoss.forward. Returns a scalar f32."""
    assert anchor.shape == positive.shape == negative.shape
    assert anchor.ndim == 2, "expected (batch, features)"
    B, D = anchor.shape
    dtype = anchor.dtype
    itemsize = jnp.dtype(dtype).itemsize
    sub = _sublane_multiple(dtype)
    budget = _vmem_budget_bytes()
    avail = budget - _HEADROOM_BYTES
    margin = float(margin)
    inv_b = 1.0 / B

    # ---- Path 1: lane-dense folding for small feature dims (D | 128). ----
    if (tile_d is None and D < _LANES and _LANES % D == 0
            and B % (_LANES // D) == 0 and (B // (_LANES // D)) >= sub):
        k = _LANES // D
        rows = B // k
        a2 = anchor.reshape(rows, _LANES)      # row-major reshape: zero data movement
        p2 = positive.reshape(rows, _LANES)
        n2 = negative.reshape(rows, _LANES)

        tb = int(tile_b) if tile_b is not None else _choose_rows(
            rows, _LANES, itemsize, sub, budget)
        num_tiles = pl.cdiv(rows, tb)

        kernel = functools.partial(
            _fold_kernel, margin=margin, feat=D, group=k, n_rows=rows,
            tile_rows=tb, need_mask=(num_tiles * tb != rows))
        in_spec = pl.BlockSpec((tb, _LANES), lambda i: (i, 0))
        partials = pl.pallas_call(
            kernel,
            grid=(num_tiles,),
            out_shape=jax.ShapeDtypeStruct((num_tiles, 1, _LANES), jnp.float32),
            in_specs=[in_spec, in_spec, in_spec],
            out_specs=pl.BlockSpec((1, 1, _LANES), lambda i: (i, 0, 0)),
            compiler_params=pltpu.CompilerParams(
                dimension_semantics=("parallel",),
                vmem_limit_bytes=budget),
        )(a2, p2, n2)
        return jnp.sum(partials[:, 0, 0]) * inv_b

    # ---- Path 2: general batch-tiled (and, if needed, feature-tiled) kernel. ----
    a2, p2, n2 = anchor, positive, negative
    rows = B
    if rows < sub:  # tiny batches: pad rows with zeros, mask them in-kernel
        pad = sub - rows
        a2 = jnp.pad(a2, ((0, pad), (0, 0)))
        p2 = jnp.pad(p2, ((0, pad), (0, 0)))
        n2 = jnp.pad(n2, ((0, pad), (0, 0)))
        rows = sub

    acc_row_bytes = _LANES * 4                  # (tb, 1) f32 scratch is lane-padded
    if tile_d is not None:
        td = int(tile_d)
    elif 6 * sub * D * itemsize + sub * acc_row_bytes <= avail:
        td = D                                  # whole feature dim per block (common case)
    else:
        # Guard for very large D: tile the feature dim on an inner "arbitrary" axis.
        td = (avail // sub - acc_row_bytes) // (6 * itemsize)
        td = max(_LANES, (td // _LANES) * _LANES)
    num_d = pl.cdiv(D, td)

    tb = int(tile_b) if tile_b is not None else _choose_rows(
        rows, td, itemsize, sub, budget, extra_per_row=acc_row_bytes)
    num_b = pl.cdiv(rows, tb)

    kernel = functools.partial(
        _tiled_kernel, margin=margin, batch=B, feat=D, tile_b=tb, tile_d=td,
        need_row_mask=(num_b * tb != B), need_col_mask=(num_d * td != D))

    in_spec = pl.BlockSpec((tb, td), lambda i, kd: (i, kd))
    partials = pl.pallas_call(
        kernel,
        grid=(num_b, num_d),
        out_shape=jax.ShapeDtypeStruct((num_b, 1, _LANES), jnp.float32),
        in_specs=[in_spec, in_spec, in_spec],
        out_specs=pl.BlockSpec((1, 1, _LANES), lambda i, kd: (i, 0, 0)),
        scratch_shapes=[pltpu.VMEM((tb, 1), jnp.float32)],
        compiler_params=pltpu.CompilerParams(
            dimension_semantics=("parallel", "arbitrary"),
            vmem_limit_bytes=budget),
    )(a2, p2, n2)
    return jnp.sum(partials[:, 0, 0]) * inv_b


def _reference_triplet_loss(anchor, positive, negative, margin=1.0):
    a = anchor.astype(jnp.float32)
    p = positive.astype(jnp.float32)
    n = negative.astype(jnp.float32)
    dp = jnp.sum((a - p) ** 2, axis=1)
    dn = jnp.sum((a - n) ** 2, axis=1)
    return jnp.mean(jnp.maximum(dp - dn + margin, 0.0))


def _check(name, got, want, rtol=1e-4, atol=1e-3):
    assert jnp.allclose(got, want, rtol=rtol, atol=atol), (name, got, want)


if __name__ == "__main__":
    def make(k, b, d, dtype=jnp.float32):
        ka, kp, kn = jax.random.split(k, 3)
        return (jax.random.normal(ka, (b, d), dtype=jnp.float32).astype(dtype),
                jax.random.normal(kp, (b, d), dtype=jnp.float32).astype(dtype),
                jax.random.normal(kn, (b, d), dtype=jnp.float32).astype(dtype))

    keys = jax.random.split(jax.random.PRNGKey(0), 6)

    # 1) Module-scale shape (batch=8, features=32): single-tile general path.
    a, p, n = make(keys[0], 8, 32)
    out = jax.block_until_ready(triplet_loss(a, p, n, margin=1.0))
    _check("t1", out, _reference_triplet_loss(a, p, n, 1.0))

    # 2) Multi-tile general path with a partial tail batch tile (row masking).
    a, p, n = make(keys[1], 20, 32)
    out = jax.block_until_ready(triplet_loss(a, p, n, margin=0.5))
    _check("t2", out, _reference_triplet_loss(a, p, n, 0.5))

    # 3) Lane-folded path (D=32 -> 4 samples per 128-lane row), two tiles.
    a, p, n = make(keys[2], 64, 32)
    out = jax.block_until_ready(triplet_loss(a, p, n, margin=1.0))
    _check("t3", out, _reference_triplet_loss(a, p, n, 1.0))

    # 4) Lane-folded path with a partial tail tile (row masking after folding).
    a, p, n = make(keys[3], 260, 32)
    out = jax.block_until_ready(triplet_loss(a, p, n, margin=0.7))
    _check("t4", out, _reference_triplet_loss(a, p, n, 0.7))

    # 5) Feature-tiled fallback (forced) with a partial feature tile (col masking).
    a, p, n = make(keys[4], 16, 320)
    out = jax.block_until_ready(triplet_loss(a, p, n, margin=1.0, tile_d=128))
    _check("t5", out, _reference_triplet_loss(a, p, n, 1.0))

    # 6) bf16 inputs exercise the 16-row sublane tiling.
    a, p, n = make(keys[5], 64, 128, dtype=jnp.bfloat16)
    out = jax.block_until_ready(triplet_loss(a, p, n, margin=1.0))
    _check("t6", out, _reference_triplet_loss(a, p, n, 1.0))

    print("KERNEL_OK")
</pallas_src>

<mosaic_0001>
module attributes {stable_mosaic.version = 11 : i64} {
  func.func @_tiled_kernel(%arg0: i32, %arg1: i32, %arg2: memref<8x32xf32, #tpu.memory_space<vmem>>, %arg3: memref<8x32xf32, #tpu.memory_space<vmem>>, %arg4: memref<8x32xf32, #tpu.memory_space<vmem>>, %arg5: memref<1x1x128xf32, #tpu.memory_space<vmem>>, %arg6: memref<8x1xf32, #tpu.memory_space<vmem>>) attributes {dimension_semantics = [#tpu.dimension_semantics<parallel>, #tpu.dimension_semantics<arbitrary>], iteration_bounds = array<i64: 1, 1>, scalar_prefetch = 0 : i64, scratch_operands = 1 : i64, tpu.core_type = #tpu.core_type<tc>, window_params = [{transform_indices = @transform_0, window_bounds = array<i64: 8, 32>}, {transform_indices = @transform_1, window_bounds = array<i64: 8, 32>}, {transform_indices = @transform_2, window_bounds = array<i64: 8, 32>}, {transform_indices = @transform_3, window_bounds = array<i64: 1, 1, 128>}]} {
    %c0 = arith.constant 0 : index
    %c0_0 = arith.constant 0 : index
    %0 = vector.load %arg2[%c0, %c0_0] : memref<8x32xf32, #tpu.memory_space<vmem>>, vector<8x32xf32>
    %c0_1 = arith.constant 0 : index
    %c0_2 = arith.constant 0 : index
    %1 = vector.load %arg3[%c0_1, %c0_2] : memref<8x32xf32, #tpu.memory_space<vmem>>, vector<8x32xf32>
    %c0_3 = arith.constant 0 : index
    %c0_4 = arith.constant 0 : index
    %2 = vector.load %arg4[%c0_3, %c0_4] : memref<8x32xf32, #tpu.memory_space<vmem>>, vector<8x32xf32>
    %3 = arith.subf %2, %1 : vector<8x32xf32>
    %4 = arith.subf %0, %1 : vector<8x32xf32>
    %5 = arith.subf %0, %2 : vector<8x32xf32>
    %6 = arith.addf %4, %5 : vector<8x32xf32>
    %7 = arith.mulf %3, %6 : vector<8x32xf32>
    %cst = arith.constant dense<0.000000e+00> : vector<8xf32>
    %8 = vector.multi_reduction <add>, %7, %cst [1] : vector<8x32xf32> to vector<8xf32>
    %9 = vector.shape_cast %8 : vector<8xf32> to vector<8x1xf32>
    %c0_i32 = arith.constant 0 : i32
    %10 = arith.cmpi eq, %arg1, %c0_i32 : i32
    %11 = arith.extui %10 : i1 to i32
    %c0_i32_5 = arith.constant 0 : i32
    %12 = arith.cmpi ne, %11, %c0_i32_5 : i32
    scf.if %12 {
      %cst_12 = arith.constant 0.000000e+00 : f32
      %19 = vector.broadcast %cst_12 : f32 to vector<8x1xf32>
      %c0_13 = arith.constant 0 : index
      %c0_14 = arith.constant 0 : index
      %20 = vector.load %arg6[%c0_13, %c0_14] : memref<8x1xf32, #tpu.memory_space<vmem>>, vector<8x1xf32>
      tpu.vector_store %arg6[%c0_13, %c0_14], %19 {strides = array<i32>} : memref<8x1xf32, #tpu.memory_space<vmem>>, vector<8x1xf32>,
    } else {
    }
    %c0_6 = arith.constant 0 : index
    %c0_7 = arith.constant 0 : index
    %13 = vector.load %arg6[%c0_6, %c0_7] : memref<8x1xf32, #tpu.memory_space<vmem>>, vector<8x1xf32>
    %14 = arith.addf %13, %9 : vector<8x1xf32>
    %c0_8 = arith.constant 0 : index
    %c0_9 = arith.constant 0 : index
    %15 = vector.load %arg6[%c0_8, %c0_9] : memref<8x1xf32, #tpu.memory_space<vmem>>, vector<8x1xf32>
    tpu.vector_store %arg6[%c0_8, %c0_9], %14 {strides = array<i32>} : memref<8x1xf32, #tpu.memory_space<vmem>>, vector<8x1xf32>,
    %c0_i32_10 = arith.constant 0 : i32
    %16 = arith.cmpi eq, %arg1, %c0_i32_10 : i32
    %17 = arith.extui %16 : i1 to i32
    %c0_i32_11 = arith.constant 0 : i32
    %18 = arith.cmpi ne, %17, %c0_i32_11 : i32
    scf.if %18 {
      %c0_12 = arith.constant 0 : index
      %c0_13 = arith.constant 0 : index
      %19 = vector.load %arg6[%c0_12, %c0_13] : memref<8x1xf32, #tpu.memory_space<vmem>>, vector<8x1xf32>
      %cst_14 = arith.constant 1.000000e+00 : f32
      %20 = vector.broadcast %cst_14 : f32 to vector<8x1xf32>
      %21 = arith.addf %19, %20 : vector<8x1xf32>
      %cst_15 = arith.constant 0.000000e+00 : f32
      %22 = vector.broadcast %cst_15 : f32 to vector<8x1xf32>
      %23 = arith.maximumf %21, %22 : vector<8x1xf32>
      %24 = vector.shape_cast %23 : vector<8x1xf32> to vector<1x8x1xf32>
      %cst_16 = arith.constant dense<0.000000e+00> : vector<1xf32>
      %25 = vector.multi_reduction <add>, %24, %cst_16 [1, 2] : vector<1x8x1xf32> to vector<1xf32>
      %26 = vector.shape_cast %25 : vector<1xf32> to vector<1x1x1xf32>
      %27 = vector.extract %26[0, 0, 0] : f32 from vector<1x1x1xf32>
      %28 = vector.broadcast %27 : f32 to vector<1x1x128xf32>
      %c0_17 = arith.constant 0 : index
      %c0_18 = arith.constant 0 : index
      %c0_19 = arith.constant 0 : index
      %29 = vector.load %arg5[%c0_17, %c0_18, %c0_19] : memref<1x1x128xf32, #tpu.memory_space<vmem>>, vector<1x1x128xf32>
      tpu.vector_store %arg5[%c0_17, %c0_18, %c0_19], %28 {strides = array<i32>} : memref<1x1x128xf32, #tpu.memory_space<vmem>>, vector<1x1x128xf32>,
    } else {
    }
    return
  }
  func.func @transform_0(%arg0: i32, %arg1: i32) -> (i32, i32) {
    %c0_i32 = arith.constant 0 : i32
    return %arg0, %arg1 : i32, i32
  }
  func.func @transform_1(%arg0: i32, %arg1: i32) -> (i32, i32) {
    %c0_i32 = arith.constant 0 : i32
    return %arg0, %arg1 : i32, i32
  }
  func.func @transform_2(%arg0: i32, %arg1: i32) -> (i32, i32) {
    %c0_i32 = arith.constant 0 : i32
    return %arg0, %arg1 : i32, i32
  }
  func.func @transform_3(%arg0: i32, %arg1: i32) -> (i32, i32, i32) {
    %c0_i32 = arith.constant 0 : i32
    %c0_i32_0 = arith.constant 0 : i32
    %c0_i32_1 = arith.constant 0 : i32
    return %arg0, %c0_i32, %c0_i32_0 : i32, i32, i32
  }
}

</mosaic_0001>

<llo_original>
// kernel: tpu_custom_call.1
$region0: #{tpu_custom_call.1}
  #allocation0 [shape = 'u32[]', space=smem, size = 0x4, offset = 0x4, fixed_abs, tag = 'smem constant byte address 0x4 - core index']
  #allocation1 [shape = 'u32[144,128]{1,0:T(1,128)}', space=vmem, size = 0x12000, scoped, tag = 'internal scratch']
  #allocation2 [shape = 'f32[8,1]{1,0:T(8,128)}', space=vmem, size = 0x1000, scoped, tag = 'scratch operand']
  %s0 = inlined_call_operand.hbm [shape: f32[8,32], index: 0, kind: input, shape index: {}]
  %s1 = inlined_call_operand.hbm [shape: f32[8,32], index: 1, kind: input, shape index: {}]
  %s2 = inlined_call_operand.hbm [shape: f32[8,32], index: 2, kind: input, shape index: {}]
  %s3 = inlined_call_operand.hbm [shape: f32[1,1,128], index: 3, kind: output, shape index: {}]
  %s4 = sld [smem:[#allocation0]]
  $region42: #{tpu_custom_call.1} parent=0
    _
  %s6 = ssub.s32 1, %s4
  %s7 = scalar_select 0, %s6, %s4
  $region1: #{tpu_custom_call.1} parent=0
    #allocation3 [shape = 'u8[4096]{0}', space=vmem, size = 0x1000, scoped, tag = 'input window, operand 0, single buffered']
    #allocation4 [shape = 's32[1]{0}', space=sflag, size = 0x4, scoped, tag = 'scoped memory for tpu_custom_call.1']
    #allocation5 [shape = 's32[1]{0}', space=sflag, size = 0x4, scoped, tag = 'scoped memory for tpu_custom_call.1']
    #allocation6 [shape = 'u8[4096]{0}', space=vmem, size = 0x1000, scoped, tag = 'input window, operand 1, single buffered']
    #allocation7 [shape = 's32[1]{0}', space=sflag, size = 0x4, scoped, tag = 'scoped memory for tpu_custom_call.1']
    #allocation8 [shape = 'u8[4096]{0}', space=vmem, size = 0x1000, scoped, tag = 'input window, operand 2, single buffered']
    #allocation9 [shape = 'u8[512]{0}', space=vmem, size = 0x400, scoped, tag = 'output window, operand 0, single buffered']
    %8 = vsyncpa [#allocation4], 0
    %9 = vsyncpa [#allocation7], 0
    %10 = vsyncpa [#allocation5], 0
    // Predicated region
    $region2: #{tpu_custom_call.1} parent=1 // pred_check
      _
    $region3: #{tpu_custom_call.1} parent=1 // pred_check_branch
      %12 = sbr.rel (0) target = $region5
    $region4: #{tpu_custom_call.1} parent=1 // pred_region
      %s14 = ssub.s32 128, 128
      %15 = vsyncadd [#allocation4], %s14
      %s17 = sshll.u32 [#allocation3], 4
      %s18 = int_to_ptr.vmem [resolvable:$true] %s17
      %20 = dma.hbm_to_vmem [thread:$0]  %s0, 128, %s18, [#allocation4]
    $region5: #{tpu_custom_call.1} parent=1 // pred_fallthru
      _
    // Predicated region
    $region6: #{tpu_custom_call.1} parent=1 // pred_check
      _
    $region7: #{tpu_custom_call.1} parent=1 // pred_check_branch
      %22 = sbr.rel (0) target = $region9
    $region8: #{tpu_custom_call.1} parent=1 // pred_region
      %s24 = ssub.s32 128, 128
      %25 = vsyncadd [#allocation7], %s24
      %s27 = sshll.u32 [#allocation6], 4
      %s28 = int_to_ptr.vmem [resolvable:$true] %s27
      %30 = dma.hbm_to_vmem [thread:$0]  %s1, 128, %s28, [#allocation7]
    $region9: #{tpu_custom_call.1} parent=1 // pred_fallthru
      _
    // Predicated region
    $region10: #{tpu_custom_call.1} parent=1 // pred_check
      _
    $region11: #{tpu_custom_call.1} parent=1 // pred_check_branch
      %32 = sbr.rel (0) target = $region13
    $region12: #{tpu_custom_call.1} parent=1 // pred_region
      %s34 = ssub.s32 128, 128
      %35 = vsyncadd [#allocation7], %s34
      %s37 = sshll.u32 [#allocation8], 4
      %s38 = int_to_ptr.vmem [resolvable:$true] %s37
      %40 = dma.hbm_to_vmem [thread:$0]  %s2, 128, %s38, [#allocation7]
    $region13: #{tpu_custom_call.1} parent=1 // pred_fallthru
      _
    // Predicated region
    $region14: #{tpu_custom_call.1} parent=1 // pred_check
      _
    $region15: #{tpu_custom_call.1} parent=1 // pred_check_branch
      %42 = sbr.rel (0) target = $region17
    $region16: #{tpu_custom_call.1} parent=1 // pred_region
      %43 = dma.done [#allocation4], 128
    $region17: #{tpu_custom_call.1} parent=1 // pred_fallthru
      _
    // Predicated region
    $region18: #{tpu_custom_call.1} parent=1 // pred_check
      _
    $region19: #{tpu_custom_call.1} parent=1 // pred_check_branch
      %45 = sbr.rel (0) target = $region21
    $region20: #{tpu_custom_call.1} parent=1 // pred_region
      %46 = dma.done [#allocation7], 128
    $region21: #{tpu_custom_call.1} parent=1 // pred_fallthru
      _
    // Predicated region
    $region22: #{tpu_custom_call.1} parent=1 // pred_check
      _
    $region23: #{tpu_custom_call.1} parent=1 // pred_check_branch
      %48 = sbr.rel (0) target = $region25
    $region24: #{tpu_custom_call.1} parent=1 // pred_region
      %49 = dma.done [#allocation7], 128
    $region25: #{tpu_custom_call.1} parent=1 // pred_fallthru
      _
    %v50 = vld [vmem:[#allocation3] sm:$0xff]
    %v51 = vld [vmem:[#allocation6] sm:$0xff]
    %v52 = vld [vmem:[#allocation8] sm:$0xff]
    %v53 = vsub.f32 %v52, %v51
    %v54 = vsub.f32 %v50, %v51
    %v55 = vsub.f32 %v50, %v52
    %v56 = vadd.f32 %v54, %v55
    %v57 = vmul.f32 %v53, %v56
    %vm58 = vcmask 261120
    %v59 = vsel %vm58, %v57, 0.0
    %60 = vadd.xlane.f32.xlu0 %v59
    %v61 = vpop.xlane.xlu0 %60
    %p62 = scmp.eq.s32.totalorder 0, 0
    // Predicated region
    $region26: #{tpu_custom_call.1} parent=1 // pred_check
      %p63 = pneg %p62
    $region27: #{tpu_custom_call.1} parent=1 // pred_check_branch
      %65 = sbr.rel (%p63) target = $region29
    $region28: #{tpu_custom_call.1} parent=1 // pred_region
      %vm66 = vcmask 7168
      %67 = vst.msk [vmem:[#allocation2] sm:$0xff] %vm66, 0.0
    $region29: #{tpu_custom_call.1} parent=1 // pred_fallthru
      _
    %v68 = vld [vmem:[#allocation2] sm:$0xff]
    %v69 = vadd.f32 %v68, %v61
    %vm70 = vcmask 7168
    %71 = vst.msk [vmem:[#allocation2] sm:$0xff] %vm70, %v69
    // Predicated region
    $region30: #{tpu_custom_call.1} parent=1 // pred_check
      %p72 = pneg %p62
    $region31: #{tpu_custom_call.1} parent=1 // pred_check_branch
      %74 = sbr.rel (%p72) target = $region33
    $region32: #{tpu_custom_call.1} parent=1 // pred_region
      %v75 = vld [vmem:[#allocation2] sm:$0xff]
      %v76 = vadd.f32 %v75, 1.0
      %v77 = vmax.f32 %v76, 0.0
      %v78 = vsel %vm70, %v77, 0.0
      %79 = vadd.xlane.f32.xlu0 %v78
      %v80 = vpop.xlane.xlu0 %79
      %v81 = vrot.slane %v80, 4
      %v82 = vadd.f32 %v80, %v81
      %v83 = vrot.slane %v82, 2
      %v84 = vadd.f32 %v82, %v83
      %v85 = vrot.slane %v84, 1
      %v86 = vadd.f32 %v84, %v85
      %s87 = vtos %v86
      %v88 = vstv %s87
      %89 = vst [vmem:[#allocation9] sm:$0x1] %v88
    $region33: #{tpu_custom_call.1} parent=1 // pred_fallthru
      _
    // Predicated region
    $region34: #{tpu_custom_call.1} parent=1 // pred_check
      _
    $region35: #{tpu_custom_call.1} parent=1 // pred_check_branch
      %91 = sbr.rel (0) target = $region37
    $region36: #{tpu_custom_call.1} parent=1 // pred_region
      %s93 = ssub.s32 16, 16
      %94 = vsyncadd [#allocation5], %s93
      %s96 = sshll.u32 [#allocation9], 4
      %s97 = int_to_ptr.vmem [resolvable:$true] %s96
      %99 = dma.vmem_to_hbm [thread:$0]  %s97, 16, %s3, [#allocation5]
    $region37: #{tpu_custom_call.1} parent=1 // pred_fallthru
      _
    // Predicated region
    $region38: #{tpu_custom_call.1} parent=1 // pred_check
      _
    $region39: #{tpu_custom_call.1} parent=1 // pred_check_branch
      %101 = sbr.rel (0) target = $region41
    $region40: #{tpu_custom_call.1} parent=1 // pred_region
      %102 = dma.done [#allocation5], 16
    $region41: #{tpu_custom_call.1} parent=1 // pred_fallthru
      _
    %103 = vsyncpa [#allocation4], 1
    %104 = vsyncpa [#allocation7], 1
    %105 = vsyncpa [#allocation5], 1

</llo_original>
